<compile_context>
chip_gen: v6e
topology: v6e:2x2x1
jax: 0.10.0
libtpu: 0.0.40
codegen_flags: <defaults>
</compile_context>

<pallas_src>
import math
import functools

import jax
import jax.numpy as jnp
from jax.experimental import pallas as pl
from jax.experimental.pallas import tpu as pltpu


def _layernorm_kernel(x_ref, gamma_ref, beta_ref, out_ref, *, eps, d_model):
    # x_ref:     (TILE_ROWS, D) VMEM tile of flattened (batch*seq, d_model) tokens
    # gamma_ref: (1, D)         VMEM, resident every step (constant index_map)
    # beta_ref:  (1, D)         VMEM, resident every step
    # out_ref:   (TILE_ROWS, D) VMEM
    x = x_ref[...].astype(jnp.float32)
    mean = jnp.mean(x, axis=-1, keepdims=True)
    xc = x - mean
    # torch.std() defaults to the unbiased estimator: divide by (D - 1).
    var = jnp.sum(xc * xc, axis=-1, keepdims=True) * (1.0 / float(d_model - 1))
    std = jnp.sqrt(var)
    # PyTorch module formula: a2 * (x - mean) / (std + eps) + b2
    y = gamma_ref[...] * (xc / (std + eps)) + beta_ref[...]
    out_ref[...] = y.astype(out_ref.dtype)


def layernorm_forward(x2d, gamma, beta, *, eps=1e-6, tile_rows=256):
    """x2d: (ntok, d_model) float; gamma/beta: (d_model,). Returns (ntok, d_model)."""
    ntok, d = x2d.shape

    # Large row tile (amortizes per-grid-step overhead), multiple of 8 sublanes.
    tile = min(tile_rows, ntok)
    tile = max(8, (tile // 8) * 8)
    n_pad = (-ntok) % tile
    if n_pad:
        x2d = jnp.pad(x2d, ((0, n_pad), (0, 0)))
    padded = ntok + n_pad

    gamma2 = jnp.asarray(gamma, dtype=jnp.float32).reshape(1, d)
    beta2 = jnp.asarray(beta, dtype=jnp.float32).reshape(1, d)

    out = pl.pallas_call(
        functools.partial(_layernorm_kernel, eps=float(eps), d_model=d),
        out_shape=jax.ShapeDtypeStruct((padded, d), x2d.dtype),
        grid_spec=pltpu.PrefetchScalarGridSpec(
            num_scalar_prefetch=0,
            grid=(padded // tile,),
            in_specs=[
                # per-step tile of token rows, full feature dim per block
                pl.BlockSpec((tile, d), lambda i: (i, 0)),
                # gamma / beta resident across the whole grid
                pl.BlockSpec((1, d), lambda i: (0, 0)),
                pl.BlockSpec((1, d), lambda i: (0, 0)),
            ],
            out_specs=pl.BlockSpec((tile, d), lambda i: (i, 0)),
        ),
        compiler_params=pltpu.CompilerParams(
            dimension_semantics=("parallel",)),
    )(x2d, gamma2, beta2)

    if n_pad:
        out = out[:ntok]
    return out


def decoder_forward(x, memory, source_mask, target_mask, norm_a2, norm_b2,
                    *, layers=(), eps=1e-6):
    """Decoder.forward: run the (externally supplied) decoder-layer stack, then
    the final LayerNorm.  Only the LayerNorm is defined by the spec, so only it
    is lowered to a Pallas kernel here."""
    # TODO(synk): DecoderLayer (self-attn / src-attn / feed-forward) is not
    # defined in the provided spec; plug Pallas attention/FFN kernels into
    # `layers` once its definition is available.
    for layer in layers:
        x = layer(x, memory, source_mask, target_mask)

    B, S, D = x.shape
    y = layernorm_forward(x.reshape(B * S, D), norm_a2, norm_b2, eps=eps)
    return y.reshape(B, S, D)


if __name__ == "__main__":
    # Small deterministic setup consistent with Decoder(layer, N=6):
    #   batch=2, seq=8, d_model (= layer.size) = 32
    B, S, d_model = 2, 8, 32
    eps = 1e-6

    key = jax.random.PRNGKey(0)
    k_x, k_mem, k_g, k_b = jax.random.split(key, 4)

    x = jax.random.normal(k_x, (B, S, d_model), dtype=jnp.float32)
    memory = jax.random.normal(k_mem, (B, S, d_model), dtype=jnp.float32)
    source_mask = jnp.ones((B, 1, S), dtype=jnp.float32)
    target_mask = jnp.tril(jnp.ones((S, S), dtype=jnp.float32))[None].repeat(B, axis=0)

    # LayerNorm parameters (a2 / b2); deterministic non-trivial values.
    a2 = 1.0 + 0.1 * jax.random.normal(k_g, (d_model,), dtype=jnp.float32)
    b2 = 0.1 * jax.random.normal(k_b, (d_model,), dtype=jnp.float32)

    out = decoder_forward(x, memory, source_mask, target_mask, a2, b2, eps=eps)
    out = jax.block_until_ready(out)

    # Pure-JAX reference of the Decoder's specified compute (final LayerNorm,
    # PyTorch semantics: unbiased std, divide by (std + eps)).
    mean = jnp.mean(x, axis=-1, keepdims=True)
    std = jnp.std(x, axis=-1, ddof=1, keepdims=True)
    ref = a2 * (x - mean) / (std + eps) + b2

    assert out.shape == (B, S, d_model)
    assert jnp.allclose(out, ref, atol=1e-5, rtol=1e-5)

    print("KERNEL_OK")
</pallas_src>

<mosaic_0001>
module attributes {stable_mosaic.version = 11 : i64} {
  func.func @_layernorm_kernel(%arg0: i32, %arg1: memref<16x32xf32, #tpu.memory_space<vmem>>, %arg2: memref<1x32xf32, #tpu.memory_space<vmem>>, %arg3: memref<1x32xf32, #tpu.memory_space<vmem>>, %arg4: memref<16x32xf32, #tpu.memory_space<vmem>>) attributes {dimension_semantics = [#tpu.dimension_semantics<parallel>], iteration_bounds = array<i64: 1>, scalar_prefetch = 0 : i64, scratch_operands = 0 : i64, tpu.core_type = #tpu.core_type<tc>, window_params = [{transform_indices = @transform_0, window_bounds = array<i64: 16, 32>}, {pipeline_mode = #tpu.pipeline_mode<synchronous>, transform_indices = @transform_1, window_bounds = array<i64: 1, 32>}, {pipeline_mode = #tpu.pipeline_mode<synchronous>, transform_indices = @transform_2, window_bounds = array<i64: 1, 32>}, {transform_indices = @transform_3, window_bounds = array<i64: 16, 32>}]} {
    %c0 = arith.constant 0 : index
    %c0_0 = arith.constant 0 : index
    %0 = vector.load %arg1[%c0, %c0_0] : memref<16x32xf32, #tpu.memory_space<vmem>>, vector<16x32xf32>
    %cst = arith.constant dense<0.000000e+00> : vector<16xf32>
    %1 = vector.multi_reduction <add>, %0, %cst [1] : vector<16x32xf32> to vector<16xf32>
    %2 = vector.shape_cast %1 : vector<16xf32> to vector<16x1xf32>
    %cst_1 = arith.constant 3.200000e+01 : f32
    %3 = vector.broadcast %cst_1 : f32 to vector<16x1xf32>
    %4 = arith.divf %2, %3 : vector<16x1xf32>
    %5 = vector.broadcast %4 : vector<16x1xf32> to vector<16x32xf32>
    %6 = arith.subf %0, %5 : vector<16x32xf32>
    %7 = arith.mulf %6, %6 : vector<16x32xf32>
    %cst_2 = arith.constant dense<0.000000e+00> : vector<16xf32>
    %8 = vector.multi_reduction <add>, %7, %cst_2 [1] : vector<16x32xf32> to vector<16xf32>
    %9 = vector.shape_cast %8 : vector<16xf32> to vector<16x1xf32>
    %cst_3 = arith.constant 0.0322580636 : f32
    %10 = vector.broadcast %cst_3 : f32 to vector<16x1xf32>
    %11 = arith.mulf %9, %10 : vector<16x1xf32>
    %12 = math.sqrt %11 : vector<16x1xf32>
    %c0_4 = arith.constant 0 : index
    %c0_5 = arith.constant 0 : index
    %13 = vector.load %arg2[%c0_4, %c0_5] : memref<1x32xf32, #tpu.memory_space<vmem>>, vector<1x32xf32>
    %cst_6 = arith.constant 9.99999997E-7 : f32
    %14 = vector.broadcast %cst_6 : f32 to vector<16x1xf32>
    %15 = arith.addf %12, %14 : vector<16x1xf32>
    %16 = vector.broadcast %15 : vector<16x1xf32> to vector<16x32xf32>
    %17 = arith.divf %6, %16 : vector<16x32xf32>
    %18 = vector.broadcast %13 : vector<1x32xf32> to vector<16x32xf32>
    %19 = arith.mulf %18, %17 : vector<16x32xf32>
    %c0_7 = arith.constant 0 : index
    %c0_8 = arith.constant 0 : index
    %20 = vector.load %arg3[%c0_7, %c0_8] : memref<1x32xf32, #tpu.memory_space<vmem>>, vector<1x32xf32>
    %21 = vector.broadcast %20 : vector<1x32xf32> to vector<16x32xf32>
    %22 = arith.addf %19, %21 : vector<16x32xf32>
    %c0_9 = arith.constant 0 : index
    %c0_10 = arith.constant 0 : index
    %23 = vector.load %arg4[%c0_9, %c0_10] : memref<16x32xf32, #tpu.memory_space<vmem>>, vector<16x32xf32>
    tpu.vector_store %arg4[%c0_9, %c0_10], %22 {strides = array<i32>} : memref<16x32xf32, #tpu.memory_space<vmem>>, vector<16x32xf32>,
    return
  }
  func.func @transform_0(%arg0: i32) -> (i32, i32) {
    %c0_i32 = arith.constant 0 : i32
    %c0_i32_0 = arith.constant 0 : i32
    return %arg0, %c0_i32 : i32, i32
  }
  func.func @transform_1(%arg0: i32) -> (i32, i32) {
    %c0_i32 = arith.constant 0 : i32
    %c0_i32_0 = arith.constant 0 : i32
    %c0_i32_1 = arith.constant 0 : i32
    return %c0_i32, %c0_i32_0 : i32, i32
  }
  func.func @transform_2(%arg0: i32) -> (i32, i32) {
    %c0_i32 = arith.constant 0 : i32
    %c0_i32_0 = arith.constant 0 : i32
    %c0_i32_1 = arith.constant 0 : i32
    return %c0_i32, %c0_i32_0 : i32, i32
  }
  func.func @transform_3(%arg0: i32) -> (i32, i32) {
    %c0_i32 = arith.constant 0 : i32
    %c0_i32_0 = arith.constant 0 : i32
    return %arg0, %c0_i32 : i32, i32
  }
}

</mosaic_0001>

<llo_original>
// kernel: tpu_custom_call.1
$region0: #{tpu_custom_call.1}
  #allocation0 [shape = 'u32[]', space=smem, size = 0x4, offset = 0x4, fixed_abs, tag = 'smem constant byte address 0x4 - core index']
  #allocation1 [shape = 'u32[144,128]{1,0:T(1,128)}', space=vmem, size = 0x12000, scoped, tag = 'internal scratch']
  %s0 = inlined_call_operand.hbm [shape: f32[16,32], index: 0, kind: input, shape index: {}]
  %s1 = inlined_call_operand.vmem [shape: f32[1,32], index: 1, kind: input, shape index: {}]
  %s2 = inlined_call_operand.vmem [shape: f32[1,32], index: 2, kind: input, shape index: {}]
  %s3 = inlined_call_operand.hbm [shape: f32[16,32], index: 3, kind: output, shape index: {}]
  %s4 = sld [smem:[#allocation0]]
  $region26: #{tpu_custom_call.1} parent=0
    _
  %s6 = ssub.s32 1, %s4
  %s7 = scalar_select 0, %s6, %s4
  $region1: #{tpu_custom_call.1} parent=0
    #allocation2 [shape = 'u8[8192]{0}', space=vmem, size = 0x2000, scoped, tag = 'input window, operand 0, single buffered']
    #allocation3 [shape = 's32[1]{0}', space=sflag, size = 0x4, scoped, tag = 'scoped memory for tpu_custom_call.1']
    #allocation4 [shape = 's32[1]{0}', space=sflag, size = 0x4, scoped, tag = 'scoped memory for tpu_custom_call.1']
    #allocation5 [shape = 'u8[8192]{0}', space=vmem, size = 0x2000, scoped, tag = 'output window, operand 0, single buffered']
    %8 = vsyncpa [#allocation3], 0
    %9 = vsyncpa [#allocation4], 0
    // Predicated region
    $region2: #{tpu_custom_call.1} parent=1 // pred_check
      _
    $region3: #{tpu_custom_call.1} parent=1 // pred_check_branch
      %11 = sbr.rel (0) target = $region5
    $region4: #{tpu_custom_call.1} parent=1 // pred_region
      %s13 = ssub.s32 256, 256
      %14 = vsyncadd [#allocation3], %s13
      %s15 = sshll.u32 [#allocation2], 4
      %s16 = int_to_ptr.vmem [resolvable:$true] %s15
      %21 = dma.hbm_to_vmem [thread:$0]  %s0, 256, %s16, [#allocation3], 128, 128, 8
    $region5: #{tpu_custom_call.1} parent=1 // pred_fallthru
      _
    // Predicated region
    $region6: #{tpu_custom_call.1} parent=1 // pred_check
      _
    $region7: #{tpu_custom_call.1} parent=1 // pred_check_branch
      %23 = sbr.rel (0) target = $region9
    $region8: #{tpu_custom_call.1} parent=1 // pred_region
      _
    $region9: #{tpu_custom_call.1} parent=1 // pred_fallthru
      _
    // Predicated region
    $region10: #{tpu_custom_call.1} parent=1 // pred_check
      _
    $region11: #{tpu_custom_call.1} parent=1 // pred_check_branch
      %25 = sbr.rel (0) target = $region13
    $region12: #{tpu_custom_call.1} parent=1 // pred_region
      _
    $region13: #{tpu_custom_call.1} parent=1 // pred_fallthru
      _
    // Predicated region
    $region14: #{tpu_custom_call.1} parent=1 // pred_check
      _
    $region15: #{tpu_custom_call.1} parent=1 // pred_check_branch
      %27 = sbr.rel (0) target = $region17
    $region16: #{tpu_custom_call.1} parent=1 // pred_region
      %28 = dma.done [#allocation3], 256
    $region17: #{tpu_custom_call.1} parent=1 // pred_fallthru
      _
    %v29 = vld [vmem:[#allocation2] sm:$0xff]
    %v30 = vld [vmem:[#allocation2 + $0x8] sm:$0xff]
    %vm31 = vcmask 261120
    %v32 = vsel %vm31, %v29, 0.0
    %33 = vadd.xlane.f32.xlu0 %v32
    %v34 = vpop.xlane.xlu0 %33
    %v35 = vsel %vm31, %v30, 0.0
    %36 = vadd.xlane.f32.xlu0 %v35
    %v37 = vpop.xlane.xlu0 %36
    %v38 = vrcp.pop 32.0
    %v39 = vmul.f32 %v34, %v38
    %v40 = vmul.f32 %v37, %v38
    %v41 = vsub.f32 %v29, %v39
    %v42 = vsub.f32 %v30, %v40
    %v43 = vmul.f32 %v41, %v41
    %v44 = vmul.f32 %v42, %v42
    %v45 = vsel %vm31, %v43, 0.0
    %46 = vadd.xlane.f32.xlu0 %v45
    %v47 = vpop.xlane.xlu0 %46
    %v48 = vsel %vm31, %v44, 0.0
    %49 = vadd.xlane.f32.xlu0 %v48
    %v50 = vpop.xlane.xlu0 %49
    %v51 = vmul.f32 %v47, 0.032258064
    %v52 = vmul.f32 %v50, 0.032258064
    %v53 = vrsqrt.pop %v51
    %v54 = vmul.f32 %v51, %v53
    %vm55 = vcmp.eq.f32.partialorder %v51, inf
    %v56 = vsel %vm55, %v51, %v54
    %vm57 = vcmp.eq.f32.partialorder %v51, 0.0
    %v58 = vand.u32 %v51, 2147483648
    %v59 = vsel %vm57, %v58, %v56
    %v60 = vrsqrt.pop %v52
    %v61 = vmul.f32 %v52, %v60
    %vm62 = vcmp.eq.f32.partialorder %v52, inf
    %v63 = vsel %vm62, %v52, %v61
    %vm64 = vcmp.eq.f32.partialorder %v52, 0.0
    %v65 = vand.u32 %v52, 2147483648
    %v66 = vsel %vm64, %v65, %v63
    %v67 = vld [vmem:[%s1] sm:$0x1]
    %v68 = vadd.f32 %v59, 1e-06
    %v69 = vadd.f32 %v66, 1e-06
    %v70 = vrcp.pop %v68
    %v71 = vmul.f32 %v41, %v70
    %v72 = vrcp.pop %v69
    %v73 = vmul.f32 %v42, %v72
    %v75 = vlaneseq
    %v76 = vshrl.u32 %v75, 7
    %v77 = vsub.s32 0, %v76
    %v78 = vrot.slane %v67, %v77
    %v80 = vmul.f32 %v78, %v71
    %v81 = vmul.f32 %v78, %v73
    %v82 = vld [vmem:[%s2] sm:$0x1]
    %v84 = vlaneseq
    %v85 = vshrl.u32 %v84, 7
    %v86 = vsub.s32 0, %v85
    %v87 = vrot.slane %v82, %v86
    %v89 = vadd.f32 %v80, %v87
    %v90 = vadd.f32 %v81, %v87
    %91 = vst.msk [vmem:[#allocation5] sm:$0xff] %vm31, %v89
    %92 = vst.msk [vmem:[#allocation5 + $0x8] sm:$0xff] %vm31, %v90
    // Predicated region
    $region18: #{tpu_custom_call.1} parent=1 // pred_check
      _
    $region19: #{tpu_custom_call.1} parent=1 // pred_check_branch
      %94 = sbr.rel (0) target = $region21
    $region20: #{tpu_custom_call.1} parent=1 // pred_region
      %s96 = ssub.s32 256, 256
      %97 = vsyncadd [#allocation4], %s96
      %s98 = sshll.u32 [#allocation5], 4
      %s99 = int_to_ptr.vmem [resolvable:$true] %s98
      %104 = dma.vmem_to_hbm [thread:$0]  %s99, 256, %s3, [#allocation4], 128, 128, 8
    $region21: #{tpu_custom_call.1} parent=1 // pred_fallthru
      _
    // Predicated region
    $region22: #{tpu_custom_call.1} parent=1 // pred_check
      _
    $region23: #{tpu_custom_call.1} parent=1 // pred_check_branch
      %106 = sbr.rel (0) target = $region25
    $region24: #{tpu_custom_call.1} parent=1 // pred_region
      %107 = dma.done [#allocation4], 256
    $region25: #{tpu_custom_call.1} parent=1 // pred_fallthru
      _
    %108 = vsyncpa [#allocation3], 1
    %109 = vsyncpa [#allocation4], 1

</llo_original>
